<compile_context>
chip_gen: v7x
topology: tpu7x:2x2x1
jax: 0.10.0
libtpu: 0.0.40
codegen_flags: <defaults>
</compile_context>

<pallas_src>
import jax
import jax.numpy as jnp
import numpy as np
from jax.experimental import pallas as pl
from jax.experimental.pallas import tpu as pltpu

LOG_STD_MAX = 2.0
LOG_STD_MIN = -20.0


def _round_up(x, m):
    return ((x + m - 1) // m) * m


# ----------------------------------------------------------------------------
# One-time parameter packing: everything constant goes into ONE padded f32 slab
# ----------------------------------------------------------------------------
def prepare_actor_params(params, edges_src, edges_dst, batch, act_dim):
    C = int(params["w_gcn"].shape[0])
    H = int(params["w1"].shape[0])
    E = int(edges_src.shape[0])
    BA, BE = batch * act_dim, batch * E
    BA_pad = _round_up(BA, 8)
    BE_pad = _round_up(max(BE, 128), 128)
    H_pad = _round_up(H, 8)

    # transposed block-diagonal one-hot gather matrices  [BA_pad, BE_pad]
    s_src_t = np.zeros((BA_pad, BE_pad), np.float32)
    s_dst_t = np.zeros((BA_pad, BE_pad), np.float32)
    es, ed = np.asarray(edges_src), np.asarray(edges_dst)
    for b in range(batch):
        for j in range(E):
            s_src_t[b * act_dim + int(es[j]), b * E + j] = 1.0
            s_dst_t[b * act_dim + int(ed[j]), b * E + j] = 1.0

    # slab row layout (all offsets static Python ints, multiples of 8 for tall blocks)
    R_SSRC = 0
    R_SDST = R_SSRC + BA_pad
    R_W2 = R_SDST + BA_pad           # [H, H] at cols 0:H ; b1 col at H, b2 col at H+1
    R_W1 = R_W2 + H_pad              # [H, 2C] at cols 0:2C
    R_HEAD = R_W1 + H_pad            # [2, H] (row0=w_mu, row1=w_sig); bias col at H
    R_GCN = R_HEAD + 8               # wg^T [C, C] at cols 0:C ; bg row below it
    rows = _round_up(R_GCN + C + 1, 8)
    width = BE_pad
    assert width >= H + 2 and width >= 2 * C

    slab = np.zeros((rows, width), np.float32)
    slab[R_SSRC:R_SSRC + BA_pad, :BE_pad] = s_src_t
    slab[R_SDST:R_SDST + BA_pad, :BE_pad] = s_dst_t
    slab[R_W2:R_W2 + H, :H] = np.asarray(params["w2"])              # y^T = W2 @ x^T
    slab[R_W2:R_W2 + H, H] = np.asarray(params["b1"])
    slab[R_W2:R_W2 + H, H + 1] = np.asarray(params["b2"])
    slab[R_W1:R_W1 + H, :2 * C] = np.asarray(params["w1"])          # y^T = W1 @ f^T
    slab[R_HEAD, :H] = np.asarray(params["w_mu"])[0]
    slab[R_HEAD + 1, :H] = np.asarray(params["w_sig"])[0]
    slab[R_HEAD, H] = float(np.asarray(params["b_mu"])[0])
    slab[R_HEAD + 1, H] = float(np.asarray(params["b_sig"])[0])
    slab[R_GCN:R_GCN + C, :C] = np.asarray(params["w_gcn"]).T       # x @ W^T
    slab[R_GCN + C, :C] = np.asarray(params["b_gcn"])

    dims = dict(C=C, H=H, E=E, BA=BA, BE=BE, BA_pad=BA_pad, BE_pad=BE_pad,
                R_SSRC=R_SSRC, R_SDST=R_SDST, R_W2=R_W2, R_W1=R_W1,
                R_HEAD=R_HEAD, R_GCN=R_GCN)
    return jnp.asarray(slab), dims


# ----------------------------------------------------------------------------
# Fused kernel factory (static dims/offsets captured in the closure)
# ----------------------------------------------------------------------------
def make_gnn_actor_forward(dims):
    C, H = dims["C"], dims["H"]
    BA, BE = dims["BA"], dims["BE"]
    BA_pad, BE_pad = dims["BA_pad"], dims["BE_pad"]
    R_SSRC, R_SDST = dims["R_SSRC"], dims["R_SDST"]
    R_W2, R_W1, R_HEAD, R_GCN = dims["R_W2"], dims["R_W1"], dims["R_HEAD"], dims["R_GCN"]
    f32 = jnp.float32

    def actor_kernel(x_ref, a_ref, slab_ref, out_ref):
        # --- static sub-views of the packed constant slab (single DMA'd operand) ---
        s_src_t = slab_ref[R_SSRC:R_SSRC + BA_pad, :]             # [BA_pad, BE_pad]
        s_dst_t = slab_ref[R_SDST:R_SDST + BA_pad, :]             # [BA_pad, BE_pad]
        w2 = slab_ref[R_W2:R_W2 + H, :H]                          # [H, H]
        b1_col = slab_ref[R_W2:R_W2 + H, H:H + 1]                 # [H, 1]
        b2_col = slab_ref[R_W2:R_W2 + H, H + 1:H + 2]             # [H, 1]
        w1 = slab_ref[R_W1:R_W1 + H, :2 * C]                      # [H, 2C]
        wh_t = slab_ref[R_HEAD:R_HEAD + 2, :H]                    # [2, H] (mu, sig)
        bh_col = slab_ref[R_HEAD:R_HEAD + 2, H:H + 1]             # [2, 1]
        wg_t = slab_ref[R_GCN:R_GCN + C, :C]                      # [C, C]
        bg_row = slab_ref[R_GCN + C:R_GCN + C + 1, :C]            # [1, C]

        # --- GCNConv (dense sym-normalized adjacency) + relu + residual -----------
        x = x_ref[...]                                            # [BA_pad, C]
        xw = jnp.dot(x, wg_t, preferred_element_type=f32)         # [BA_pad, C]
        agg = jnp.dot(a_ref[...], xw, preferred_element_type=f32) # [BA_pad, C]
        h = jnp.maximum(agg + bg_row, 0.0) + x                    # [BA_pad, C]

        # --- lin1: transposed, lane-dense (edges on the 128-lane axis) ------------
        h_t = h.T                                                 # [C, BA_pad]
        g_src = jnp.dot(h_t, s_src_t, preferred_element_type=f32) # [C, BE_pad]
        g_dst = jnp.dot(h_t, s_dst_t, preferred_element_type=f32) # [C, BE_pad]
        feat = jnp.concatenate([g_src, g_dst], axis=0)            # [2C, BE_pad]
        e1 = jnp.dot(w1, feat, preferred_element_type=f32) + b1_col
        e1 = jnp.maximum(e1, 0.01 * e1)                           # leaky_relu, [H, BE_pad]

        # --- lin2 ------------------------------------------------------------------
        e2 = jnp.dot(w2, e1, preferred_element_type=f32) + b2_col
        e2 = jnp.maximum(e2, 0.01 * e2)                           # [H, BE_pad]

        # --- merged heads: row 0 = mu_pre, row 1 = log_std_pre ---------------------
        heads = jnp.dot(wh_t, e2, preferred_element_type=f32) + bh_col   # [2, BE_pad]

        mu_raw = heads[0:1, :] + 1e-10
        sp = jnp.maximum(mu_raw, 0.0) + jnp.log1p(jnp.exp(-jnp.abs(mu_raw)))
        mu = jnp.where(mu_raw > 20.0, mu_raw, sp)                 # softplus (torch threshold=20)
        std = jnp.exp(jnp.clip(heads[1:2, :], LOG_STD_MIN, LOG_STD_MAX))

        out_ref[...] = jnp.concatenate([mu, std], axis=0).astype(out_ref.dtype)

    vmem = pl.BlockSpec(memory_space=pltpu.MemorySpace.VMEM)
    call = pl.pallas_call(
        actor_kernel,
        out_shape=jax.ShapeDtypeStruct((2, BE_pad), jnp.float32),
        in_specs=[vmem, vmem, vmem],
        out_specs=vmem,
    )

    def forward(state, a_norm_pad, slab):
        # zero-pad node rows BA -> BA_pad; padded rows never reach the output because
        # the transposed gather matrices have zero rows there.
        state_p = jnp.pad(state.astype(jnp.float32), ((0, BA_pad - BA), (0, 0)))
        out = call(state_p, a_norm_pad, slab)
        return out[0, :BE], out[1, :BE]     # mu, std (flat over B*E); action == mu

    return forward


# ----------------------------------------------------------------------------
# Dense GCN normalization (matches torch_geometric GCNConv defaults)
# ----------------------------------------------------------------------------
def gcn_norm_dense(edge_index, num_nodes):
    src, dst = edge_index[0], edge_index[1]
    # scatter-add so duplicate edges keep their multiplicity (like PyG)
    a = jnp.zeros((num_nodes, num_nodes), jnp.float32).at[dst, src].add(1.0)
    a_hat = a + jnp.eye(num_nodes, dtype=jnp.float32)
    deg = a_hat.sum(axis=1)
    d_inv_sqrt = 1.0 / jnp.sqrt(deg)
    return d_inv_sqrt[:, None] * a_hat * d_inv_sqrt[None, :]


# ----------------------------------------------------------------------------
# Pure-JAX reference (mirrors the PyTorch module)
# ----------------------------------------------------------------------------
def reference_forward(state, a_norm, params, edges_src, edges_dst, batch, act_dim, in_channels):
    leaky = lambda v: jnp.where(v > 0, v, 0.01 * v)
    h = jnp.maximum(a_norm @ (state @ params["w_gcn"].T) + params["b_gcn"], 0.0) + state
    x = h.reshape(batch, act_dim, in_channels)
    ef = jnp.concatenate([x[:, edges_src, :], x[:, edges_dst, :]], axis=2)
    h1 = leaky(ef @ params["w1"].T + params["b1"])
    h2 = leaky(h1 @ params["w2"].T + params["b2"])
    log_std = jnp.clip(h2 @ params["w_sig"].T + params["b_sig"], LOG_STD_MIN, LOG_STD_MAX)
    std = jnp.exp(log_std)[..., 0]
    mu = jax.nn.softplus(h2 @ params["w_mu"].T + params["b_mu"] + 1e-10)[..., 0]
    return mu, std


if __name__ == "__main__":
    # small shapes consistent with the module defaults
    in_channels = 4
    hidden = 32
    act_dim = 14
    batch = 2
    n_nodes = batch * act_dim

    # deterministic parameters
    key = jax.random.PRNGKey(0)
    ks = jax.random.split(key, 12)
    scale = 0.1
    params = {
        "w_gcn": scale * jax.random.normal(ks[0], (in_channels, in_channels), jnp.float32),
        "b_gcn": scale * jax.random.normal(ks[1], (in_channels,), jnp.float32),
        "w1":    scale * jax.random.normal(ks[2], (hidden, 2 * in_channels), jnp.float32),
        "b1":    scale * jax.random.normal(ks[3], (hidden,), jnp.float32),
        "w2":    scale * jax.random.normal(ks[4], (hidden, hidden), jnp.float32),
        "b2":    scale * jax.random.normal(ks[5], (hidden,), jnp.float32),
        "w_mu":  scale * jax.random.normal(ks[6], (1, hidden), jnp.float32),
        "b_mu":  scale * jax.random.normal(ks[7], (1,), jnp.float32),
        "w_sig": scale * jax.random.normal(ks[8], (1, hidden), jnp.float32),
        "b_sig": scale * jax.random.normal(ks[9], (1,), jnp.float32),
    }

    # deterministic input state [N, C]
    state = jax.random.normal(ks[10], (n_nodes, in_channels), jnp.float32)

    # GCN graph: block-diagonal symmetric ring over each batch's act_dim nodes
    ei_src, ei_dst = [], []
    for b in range(batch):
        off = b * act_dim
        for i in range(act_dim):
            j = (i + 1) % act_dim
            ei_src += [off + i, off + j]
            ei_dst += [off + j, off + i]
    edge_index = jnp.array([ei_src, ei_dst], dtype=jnp.int32)
    a_norm = gcn_norm_dense(edge_index, n_nodes)

    # self.edges: deterministic (src, dst) pairs over act_dim regions (ring + self loops)
    edge_pairs = [(i, (i + 1) % act_dim) for i in range(act_dim)] + \
                 [(i, i) for i in range(act_dim)]
    edges = np.array(edge_pairs, dtype=np.int32)                 # [E, 2], E = 28
    edges_src = jnp.array(edges[:, 0])
    edges_dst = jnp.array(edges[:, 1])
    n_edges = edges.shape[0]

    # one-time packing of all constants into one padded slab + padded adjacency
    slab, dims = prepare_actor_params(params, edges_src, edges_dst, batch, act_dim)
    ba_pad = dims["BA_pad"]
    a_norm_pad = jnp.pad(a_norm, ((0, ba_pad - n_nodes), (0, ba_pad - n_nodes)))

    forward = jax.jit(make_gnn_actor_forward(dims))
    mu_flat, std_flat = forward(state, a_norm_pad, slab)
    jax.block_until_ready((mu_flat, std_flat))

    mu = mu_flat.reshape(batch, n_edges)
    std = std_flat.reshape(batch, n_edges)

    mu_ref, std_ref = reference_forward(state, a_norm, params, edges_src, edges_dst,
                                        batch, act_dim, in_channels)
    np.testing.assert_allclose(np.asarray(mu), np.asarray(mu_ref), rtol=1e-4, atol=1e-5)
    np.testing.assert_allclose(np.asarray(std), np.asarray(std_ref), rtol=1e-4, atol=1e-5)

    print("KERNEL_OK")
</pallas_src>

<mosaic_0001>
module attributes {stable_mosaic.version = 11 : i64} {
  func.func @actor_kernel(%arg0: memref<32x4xf32, #tpu.memory_space<vmem>>, %arg1: memref<32x32xf32, #tpu.memory_space<vmem>>, %arg2: memref<144x128xf32, #tpu.memory_space<vmem>>, %arg3: memref<2x128xf32, #tpu.memory_space<vmem>>) attributes {dimension_semantics = [], scalar_prefetch = 0 : i64, scratch_operands = 0 : i64, tpu.core_type = #tpu.core_type<tc>} {
    %c0 = arith.constant 0 : index
    %c0_0 = arith.constant 0 : index
    %0 = vector.load %arg2[%c0, %c0_0] : memref<144x128xf32, #tpu.memory_space<vmem>>, vector<32x128xf32>
    %c32 = arith.constant 32 : index
    %c0_1 = arith.constant 0 : index
    %1 = vector.load %arg2[%c32, %c0_1] : memref<144x128xf32, #tpu.memory_space<vmem>>, vector<32x128xf32>
    %c64 = arith.constant 64 : index
    %c0_2 = arith.constant 0 : index
    %2 = vector.load %arg2[%c64, %c0_2] : memref<144x128xf32, #tpu.memory_space<vmem>>, vector<32x32xf32>
    %c64_3 = arith.constant 64 : index
    %c32_4 = arith.constant 32 : index
    %3 = vector.load %arg2[%c64_3, %c32_4] : memref<144x128xf32, #tpu.memory_space<vmem>>, vector<32x1xf32>
    %c64_5 = arith.constant 64 : index
    %c33 = arith.constant 33 : index
    %4 = vector.load %arg2[%c64_5, %c33] : memref<144x128xf32, #tpu.memory_space<vmem>>, vector<32x1xf32>
    %c96 = arith.constant 96 : index
    %c0_6 = arith.constant 0 : index
    %5 = vector.load %arg2[%c96, %c0_6] : memref<144x128xf32, #tpu.memory_space<vmem>>, vector<32x8xf32>
    %c128 = arith.constant 128 : index
    %c0_7 = arith.constant 0 : index
    %6 = vector.load %arg2[%c128, %c0_7] : memref<144x128xf32, #tpu.memory_space<vmem>>, vector<2x32xf32>
    %c128_8 = arith.constant 128 : index
    %c32_9 = arith.constant 32 : index
    %7 = vector.load %arg2[%c128_8, %c32_9] : memref<144x128xf32, #tpu.memory_space<vmem>>, vector<2x1xf32>
    %c136 = arith.constant 136 : index
    %c0_10 = arith.constant 0 : index
    %8 = vector.load %arg2[%c136, %c0_10] : memref<144x128xf32, #tpu.memory_space<vmem>>, vector<4x4xf32>
    %c140 = arith.constant 140 : index
    %c0_11 = arith.constant 0 : index
    %9 = vector.load %arg2[%c140, %c0_11] : memref<144x128xf32, #tpu.memory_space<vmem>>, vector<1x4xf32>
    %c0_12 = arith.constant 0 : index
    %c0_13 = arith.constant 0 : index
    %10 = vector.load %arg0[%c0_12, %c0_13] : memref<32x4xf32, #tpu.memory_space<vmem>>, vector<32x4xf32>
    %cst = arith.constant dense<0.000000e+00> : vector<32x4xf32>
    %11 = tpu.matmul %10, %8, %cst {dimension_numbers = #tpu.dot_dimension_numbers<[1], [0], [0], [1], [0, 0, 1, 1], [], []>} : vector<32x4xf32>, vector<4x4xf32>, vector<32x4xf32> -> vector<32x4xf32>
    %c0_14 = arith.constant 0 : index
    %c0_15 = arith.constant 0 : index
    %12 = vector.load %arg1[%c0_14, %c0_15] : memref<32x32xf32, #tpu.memory_space<vmem>>, vector<32x32xf32>
    %cst_16 = arith.constant dense<0.000000e+00> : vector<32x4xf32>
    %13 = tpu.matmul %12, %11, %cst_16 {dimension_numbers = #tpu.dot_dimension_numbers<[1], [0], [0], [1], [0, 0, 1, 1], [], []>} : vector<32x32xf32>, vector<32x4xf32>, vector<32x4xf32> -> vector<32x4xf32>
    %14 = vector.broadcast %9 : vector<1x4xf32> to vector<32x4xf32>
    %15 = arith.addf %13, %14 : vector<32x4xf32>
    %cst_17 = arith.constant 0.000000e+00 : f32
    %16 = vector.broadcast %cst_17 : f32 to vector<32x4xf32>
    %17 = arith.maximumf %15, %16 : vector<32x4xf32>
    %18 = arith.addf %17, %10 : vector<32x4xf32>
    %19 = tpu.transpose %18, [1, 0] : vector<32x4xf32> -> vector<4x32xf32>
    %cst_18 = arith.constant dense<0.000000e+00> : vector<4x128xf32>
    %20 = tpu.matmul %19, %0, %cst_18 {dimension_numbers = #tpu.dot_dimension_numbers<[1], [0], [0], [1], [0, 0, 1, 1], [], []>} : vector<4x32xf32>, vector<32x128xf32>, vector<4x128xf32> -> vector<4x128xf32>
    %cst_19 = arith.constant dense<0.000000e+00> : vector<4x128xf32>
    %21 = tpu.matmul %19, %1, %cst_19 {dimension_numbers = #tpu.dot_dimension_numbers<[1], [0], [0], [1], [0, 0, 1, 1], [], []>} : vector<4x32xf32>, vector<32x128xf32>, vector<4x128xf32> -> vector<4x128xf32>
    %22 = tpu.concatenate %20, %21 in 0 : vector<4x128xf32>, vector<4x128xf32> -> vector<8x128xf32>
    %cst_20 = arith.constant dense<0.000000e+00> : vector<32x128xf32>
    %23 = tpu.matmul %5, %22, %cst_20 {dimension_numbers = #tpu.dot_dimension_numbers<[1], [0], [0], [1], [0, 0, 1, 1], [], []>} : vector<32x8xf32>, vector<8x128xf32>, vector<32x128xf32> -> vector<32x128xf32>
    %24 = vector.broadcast %3 : vector<32x1xf32> to vector<32x128xf32>
    %25 = arith.addf %23, %24 : vector<32x128xf32>
    %cst_21 = arith.constant 0.00999999977 : f32
    %26 = vector.broadcast %cst_21 : f32 to vector<32x128xf32>
    %27 = arith.mulf %26, %25 : vector<32x128xf32>
    %28 = arith.maximumf %25, %27 : vector<32x128xf32>
    %cst_22 = arith.constant dense<0.000000e+00> : vector<32x128xf32>
    %29 = tpu.matmul %2, %28, %cst_22 {dimension_numbers = #tpu.dot_dimension_numbers<[1], [0], [0], [1], [0, 0, 1, 1], [], []>} : vector<32x32xf32>, vector<32x128xf32>, vector<32x128xf32> -> vector<32x128xf32>
    %30 = vector.broadcast %4 : vector<32x1xf32> to vector<32x128xf32>
    %31 = arith.addf %29, %30 : vector<32x128xf32>
    %cst_23 = arith.constant 0.00999999977 : f32
    %32 = vector.broadcast %cst_23 : f32 to vector<32x128xf32>
    %33 = arith.mulf %32, %31 : vector<32x128xf32>
    %34 = arith.maximumf %31, %33 : vector<32x128xf32>
    %cst_24 = arith.constant dense<0.000000e+00> : vector<2x128xf32>
    %35 = tpu.matmul %6, %34, %cst_24 {dimension_numbers = #tpu.dot_dimension_numbers<[1], [0], [0], [1], [0, 0, 1, 1], [], []>} : vector<2x32xf32>, vector<32x128xf32>, vector<2x128xf32> -> vector<2x128xf32>
    %36 = vector.broadcast %7 : vector<2x1xf32> to vector<2x128xf32>
    %37 = arith.addf %35, %36 : vector<2x128xf32>
    %38 = vector.extract_strided_slice %37 {offsets = [0, 0], sizes = [1, 128], strides = [1, 1]} : vector<2x128xf32> to vector<1x128xf32>
    %cst_25 = arith.constant 1.000000e-10 : f32
    %39 = vector.broadcast %cst_25 : f32 to vector<1x128xf32>
    %40 = arith.addf %38, %39 : vector<1x128xf32>
    %cst_26 = arith.constant 0.000000e+00 : f32
    %41 = vector.broadcast %cst_26 : f32 to vector<1x128xf32>
    %42 = arith.maximumf %40, %41 : vector<1x128xf32>
    %43 = math.absf %40 : vector<1x128xf32>
    %cst_27 = arith.constant 0.000000e+00 : f32
    %44 = vector.broadcast %cst_27 : f32 to vector<1x128xf32>
    %45 = arith.subf %44, %43 : vector<1x128xf32>
    %46 = math.exp %45 : vector<1x128xf32>
    %47 = math.log1p %46 : vector<1x128xf32>
    %48 = arith.addf %42, %47 : vector<1x128xf32>
    %cst_28 = arith.constant 2.000000e+01 : f32
    %49 = vector.broadcast %cst_28 : f32 to vector<1x128xf32>
    %50 = arith.cmpf ogt, %40, %49 : vector<1x128xf32>
    %51 = arith.select %50, %40, %48 : vector<1x128xi1>, vector<1x128xf32>
    %52 = vector.extract_strided_slice %37 {offsets = [1, 0], sizes = [1, 128], strides = [1, 1]} : vector<2x128xf32> to vector<1x128xf32>
    %cst_29 = arith.constant -2.000000e+01 : f32
    %cst_30 = arith.constant 2.000000e+00 : f32
    %53 = vector.broadcast %cst_29 : f32 to vector<1x128xf32>
    %54 = arith.maximumf %53, %52 : vector<1x128xf32>
    %55 = vector.broadcast %cst_30 : f32 to vector<1x128xf32>
    %56 = arith.minimumf %55, %54 : vector<1x128xf32>
    %57 = math.exp %56 : vector<1x128xf32>
    %58 = tpu.concatenate %51, %57 in 0 : vector<1x128xf32>, vector<1x128xf32> -> vector<2x128xf32>
    %c0_31 = arith.constant 0 : index
    %c0_32 = arith.constant 0 : index
    %59 = vector.load %arg3[%c0_31, %c0_32] : memref<2x128xf32, #tpu.memory_space<vmem>>, vector<2x128xf32>
    tpu.vector_store %arg3[%c0_31, %c0_32], %58 {strides = array<i32>} : memref<2x128xf32, #tpu.memory_space<vmem>>, vector<2x128xf32>,
    return
  }
}

</mosaic_0001>

<llo_original>
// kernel: forward.1
$region0: #{forward.1}
  #allocation0 [shape = 'u32[]', space=smem, size = 0x4, offset = 0x4, fixed_abs, tag = 'smem constant byte address 0x4 - core index']
  #allocation1 [shape = 'u32[144,128]{1,0:T(1,128)}', space=vmem, size = 0x12000, scoped, tag = 'internal scratch']
  %s0 = inlined_call_operand.vmem [shape: f32[32,4], index: 0, kind: input, shape index: {}]
  %s1 = inlined_call_operand.vmem [shape: f32[32,32], index: 1, kind: input, shape index: {}]
  %s2 = inlined_call_operand.hbm [shape: f32[144,128], index: 2, kind: input, shape index: {}]
  %s3 = inlined_call_operand.vmem [shape: f32[2,128], index: 3, kind: output, shape index: {}]
  %s4 = sld [smem:[#allocation0]]
  $region26: #{forward.1} parent=0
    _
  %s6 = ssub.s32 1, %s4
  %s7 = scalar_select 0, %s6, %s4
  $region1: #{forward.1} parent=0
    #allocation2 [shape = 'u8[73728]{0}', space=vmem, size = 0x12000, scoped, tag = 'input window, operand 2, single buffered']
    #allocation3 [shape = 's32[1]{0}', space=sflag, size = 0x4, scoped, tag = 'scoped memory for forward.1']
    %8 = vsyncpa [#allocation3], 0
    // Predicated region
    $region2: #{forward.1} parent=1 // pred_check
      _
    $region3: #{forward.1} parent=1 // pred_check_branch
      %10 = sbr.rel (0) target = $region5
    $region4: #{forward.1} parent=1 // pred_region
      _
    $region5: #{forward.1} parent=1 // pred_fallthru
      _
    // Predicated region
    $region6: #{forward.1} parent=1 // pred_check
      _
    $region7: #{forward.1} parent=1 // pred_check_branch
      %12 = sbr.rel (0) target = $region9
    $region8: #{forward.1} parent=1 // pred_region
      _
    $region9: #{forward.1} parent=1 // pred_fallthru
      _
    // Predicated region
    $region10: #{forward.1} parent=1 // pred_check
      _
    $region11: #{forward.1} parent=1 // pred_check_branch
      %14 = sbr.rel (0) target = $region13
    $region12: #{forward.1} parent=1 // pred_region
      %s16 = ssub.s32 2304, 2304
      %17 = vsyncadd [#allocation3], %s16
      %s18 = sshll.u32 [#allocation2], 4
      %s19 = int_to_ptr.vmem [resolvable:$true] %s18
      %24 = dma.hbm_to_vmem [thread:$0]  %s2, 2304, %s19, [#allocation3], 128, 128, 8
    $region13: #{forward.1} parent=1 // pred_fallthru
      _
    // Predicated region
    $region14: #{forward.1} parent=1 // pred_check
      _
    $region15: #{forward.1} parent=1 // pred_check_branch
      %26 = sbr.rel (0) target = $region17
    $region16: #{forward.1} parent=1 // pred_region
      %27 = dma.done [#allocation3], 2304
    $region17: #{forward.1} parent=1 // pred_fallthru
      _
    %v28 = vld [vmem:[#allocation2] sm:$0xff]
    %v29 = vld [vmem:[#allocation2 + $0x8] sm:$0xff]
    %v30 = vld [vmem:[#allocation2 + $0x10] sm:$0xff]
    %v31 = vld [vmem:[#allocation2 + $0x18] sm:$0xff]
    %v32 = vld [vmem:[#allocation2 + $0x20] sm:$0xff]
    %v33 = vld [vmem:[#allocation2 + $0x28] sm:$0xff]
    %v34 = vld [vmem:[#allocation2 + $0x30] sm:$0xff]
    %v35 = vld [vmem:[#allocation2 + $0x38] sm:$0xff]
    %v36 = vld [vmem:[#allocation2 + $0x40] sm:$0xff]
    %v37 = vld [vmem:[#allocation2 + $0x48] sm:$0xff]
    %v38 = vld [vmem:[#allocation2 + $0x50] sm:$0xff]
    %v39 = vld [vmem:[#allocation2 + $0x58] sm:$0xff]
    %v40 = vld [vmem:[#allocation2 + $0x60] sm:$0xff]
    %v41 = vld [vmem:[#allocation2 + $0x68] sm:$0xff]
    %v42 = vld [vmem:[#allocation2 + $0x70] sm:$0xff]
    %v43 = vld [vmem:[#allocation2 + $0x78] sm:$0xff]
    %v44 = vld [vmem:[#allocation2 + $0x80] sm:$0x3]
    %v45 = vld [vmem:[#allocation2 + $0x88] sm:$0xf]
    %v46 = vld [vmem:[#allocation2 + $0x8c] sm:$0x1]
    %v47 = vld [vmem:[%s0] sm:$0xff]
    %v48 = vld [vmem:[%s0 + $0x8] sm:$0xff]
    %v49 = vld [vmem:[%s0 + $0x10] sm:$0xff]
    %v50 = vld [vmem:[%s0 + $0x18] sm:$0xff]
    %vm51 = vcmask 31744
    %v53 = vsel %vm51, %v47, 0
    %v56 = vsel %vm51, %v48, 0
    %v59 = vsel %vm51, %v49, 0
    %v62 = vsel %vm51, %v50, 0
    %vm64 = vcmask 1043456
    %v66 = vsel %vm64, %v45, 0
    %68 = vmatprep.subr.mxu0 0.0
    %69 = vmatpush1.msra.mxu0 %v66
    %70 = vmatprep.subr.mxu0 0.0
    %71 = vmatpush1.msra.mxu0 0.0
    %72 = vmatprep.subr.mxu0 0.0
    %73 = vmatpush1.msra.mxu0 0.0
    %74 = vmatprep.subr.mxu0 0.0
    %75 = vmatpush1.msra.mxu0 0.0
    %76 = vmatprep.subr.mxu0 0.0
    %77 = vmatpush1.msra.mxu0 0.0
    %78 = vmatprep.subr.mxu0 0.0
    %79 = vmatpush1.msra.mxu0 0.0
    %80 = vmatprep.subr.mxu0 0.0
    %81 = vmatpush1.msra.mxu0 0.0
    %82 = vmatprep.subr.mxu0 0.0
    %83 = vmatpush1.msra.mxu0 0.0
    %84 = vmatprep.subr.mxu0 0.0
    %85 = vmatpush1.msra.mxu0 0.0
    %86 = vmatprep.subr.mxu0 0.0
    %87 = vmatpush1.msra.mxu0 0.0
    %88 = vmatprep.subr.mxu0 0.0
    %89 = vmatpush1.msra.mxu0 0.0
    %90 = vmatprep.subr.mxu0 0.0
    %91 = vmatpush1.msra.mxu0 0.0
    %92 = vmatprep.subr.mxu0 0.0
    %93 = vmatpush1.msra.mxu0 0.0
    %94 = vmatprep.subr.mxu0 0.0
    %95 = vmatpush1.msra.mxu0 0.0
    %96 = vmatprep.subr.mxu0 0.0
    %97 = vmatpush1.msra.mxu0 0.0
    %98 = vmatprep.subr.mxu0 0.0
    %99 = vmatpush1.msra.mxu0 0.0
    %100 = vmatprep.subr.mxu0 0.0
    %101 = vmatpush1.msra.mxu0 0.0
    %102 = vmatprep.subr.mxu0 0.0
    %103 = vmatpush1.msra.mxu0 0.0
    %104 = vmatprep.subr.mxu0 0.0
    %105 = vmatpush1.msra.mxu0 0.0
    %106 = vmatprep.subr.mxu0 0.0
    %107 = vmatpush1.msra.mxu0 0.0
    %108 = vmatprep.subr.mxu0 0.0
    %109 = vmatpush1.msra.mxu0 0.0
    %110 = vmatprep.subr.mxu0 0.0
    %111 = vmatpush1.msra.mxu0 0.0
    %112 = vmatprep.subr.mxu0 0.0
    %113 = vmatpush1.msra.mxu0 0.0
    %114 = vmatprep.subr.mxu0 0.0
    %115 = vmatpush1.msra.mxu0 0.0
    %116 = vmatprep.subr.mxu0 0.0
    %117 = vmatpush1.msra.mxu0 0.0
    %118 = vmatprep.subr.mxu0 0.0
    %119 = vmatpush1.msra.mxu0 0.0
    %120 = vmatprep.subr.mxu0 0.0
    %121 = vmatpush1.msra.mxu0 0.0
    %122 = vmatprep.subr.mxu0 0.0
    %123 = vmatpush1.msra.mxu0 0.0
    %124 = vmatprep.subr.mxu0 0.0
    %125 = vmatpush1.msra.mxu0 0.0
    %126 = vmatprep.subr.mxu0 0.0
    %127 = vmatpush1.msra.mxu0 0.0
    %128 = vmatprep.subr.mxu0 0.0
    %129 = vmatpush1.msra.mxu0 0.0
    %130 = vmatprep.subr.mxu0 0.0
    %131 = vmatpush1.msra.mxu0 0.0
    %132 = vmatprep.mubr.f32.mxu0 0.0
    %133 = vmatmul.mubr.f32.gmra.mrb[0].mxu0 %v53
    %v134 = vpop.f32.mrb[0].mxu0
    %v135 = vadd.f32 0.0, %v134
    %v136 = vpop.f32.mrb[0].mxu0
    %137 = vmatprep.mubr.f32.mxu0 0.0
    %138 = vmatmul.mubr.f32.gmra.mrb[0].mxu0 %v56
    %v139 = vpop.f32.mrb[0].mxu0
    %v140 = vadd.f32 0.0, %v139
    %v141 = vpop.f32.mrb[0].mxu0
    %142 = vmatprep.mubr.f32.mxu0 0.0
    %143 = vmatmul.mubr.f32.gmra.mrb[0].mxu0 %v59
    %v144 = vpop.f32.mrb[0].mxu0
    %v145 = vadd.f32 0.0, %v144
    %v146 = vpop.f32.mrb[0].mxu0
    %147 = vmatprep.mubr.f32.mxu0 0.0
    %148 = vmatmul.mubr.f32.gmra.mrb[0].mxu0 %v62
    %v149 = vpop.f32.mrb[0].mxu0
    %v150 = vadd.f32 0.0, %v149
    %v151 = vpop.f32.mrb[0].mxu0
    %152 = vdwg.mxu0
    %v153 = vld [vmem:[%s1] sm:$0xff]
    %v154 = vld [vmem:[%s1 + $0x8] sm:$0xff]
    %v155 = vld [vmem:[%s1 + $0x10] sm:$0xff]
    %v156 = vld [vmem:[%s1 + $0x18] sm:$0xff]
    %v157 = vlaneseq
    %v158 = vshrl.u32 %v157, 7
    %v159 = vsub.s32 0, %v158
    %v160 = vrot.slane %v46, %v159
    %vm161 = vcmask 261120
    %v163 = vsel %vm161, %v153, 0
    %v166 = vsel %vm161, %v154, 0
    %v169 = vsel %vm161, %v155, 0
    %v172 = vsel %vm161, %v156, 0
    %174 = vmatprep.subr.mxu0 0.0
    %175 = vmatpush1.msra.mxu0 %v135
    %176 = vmatprep.subr.mxu0 0.0
    %177 = vmatpush1.msra.mxu0 %v140
    %178 = vmatprep.subr.mxu0 0.0
    %179 = vmatpush1.msra.mxu0 %v145
    %180 = vmatprep.subr.mxu0 0.0
    %181 = vmatpush1.msra.mxu0 %v150
    %182 = vmatprep.subr.mxu0 0.0
    %183 = vmatpush1.msra.mxu0 0.0
    %184 = vmatprep.subr.mxu0 0.0
    %185 = vmatpush1.msra.mxu0 0.0
    %186 = vmatprep.subr.mxu0 0.0
    %187 = vmatpush1.msra.mxu0 0.0
    %188 = vmatprep.subr.mxu0 0.0
    %189 = vmatpush1.msra.mxu0 0.0
    %190 = vmatprep.subr.mxu0 0.0
    %191 = vmatpush1.msra.mxu0 0.0
    %192 = vmatprep.subr.mxu0 0.0
    %193 = vmatpush1.msra.mxu0 0.0
    %194 = vmatprep.subr.mxu0 0.0
    %195 = vmatpush1.msra.mxu0 0.0
    %196 = vmatprep.subr.mxu0 0.0
    %197 = vmatpush1.msra.mxu0 0.0
    %198 = vmatprep.subr.mxu0 0.0
    %199 = vmatpush1.msra.mxu0 0.0
    %200 = vmatprep.subr.mxu0 0.0
    %201 = vmatpush1.msra.mxu0 0.0
    %202 = vmatprep.subr.mxu0 0.0
    %203 = vmatpush1.msra.mxu0 0.0
    %204 = vmatprep.subr.mxu0 0.0
    %205 = vmatpush1.msra.mxu0 0.0
    %206 = vmatprep.subr.mxu0 0.0
    %207 = vmatpush1.msra.mxu0 0.0
    %208 = vmatprep.subr.mxu0 0.0
    %209 = vmatpush1.msra.mxu0 0.0
    %210 = vmatprep.subr.mxu0 0.0
    %211 = vmatpush1.msra.mxu0 0.0
    %212 = vmatprep.subr.mxu0 0.0
    %213 = vmatpush1.msra.mxu0 0.0
    %214 = vmatprep.subr.mxu0 0.0
    %215 = vmatpush1.msra.mxu0 0.0
    %216 = vmatprep.subr.mxu0 0.0
    %217 = vmatpush1.msra.mxu0 0.0
    %218 = vmatprep.subr.mxu0 0.0
    %219 = vmatpush1.msra.mxu0 0.0
    %220 = vmatprep.subr.mxu0 0.0
    %221 = vmatpush1.msra.mxu0 0.0
    %222 = vmatprep.subr.mxu0 0.0
    %223 = vmatpush1.msra.mxu0 0.0
    %224 = vmatprep.subr.mxu0 0.0
    %225 = vmatpush1.msra.mxu0 0.0
    %226 = vmatprep.subr.mxu0 0.0
    %227 = vmatpush1.msra.mxu0 0.0
    %228 = vmatprep.subr.mxu0 0.0
    %229 = vmatpush1.msra.mxu0 0.0
    %230 = vmatprep.subr.mxu0 0.0
    %231 = vmatpush1.msra.mxu0 0.0
    %232 = vmatprep.subr.mxu0 0.0
    %233 = vmatpush1.msra.mxu0 0.0
    %234 = vmatprep.subr.mxu0 0.0
    %235 = vmatpush1.msra.mxu0 0.0
    %236 = vmatprep.subr.mxu0 0.0
    %237 = vmatpush1.msra.mxu0 0.0
    %238 = vmatprep.mubr.f32.mxu0 0.0
    %239 = vmatmul.mubr.f32.gmra.mrb[0].mxu0 %v163
    %v240 = vpop.f32.mrb[0].mxu0
    %v241 = vadd.f32 %v160, %v240
    %v242 = vpop.f32.mrb[0].mxu0
    %243 = vmatprep.mubr.f32.mxu0 0.0
    %244 = vmatmul.mubr.f32.gmra.mrb[0].mxu0 %v166
    %v245 = vpop.f32.mrb[0].mxu0
    %v246 = vadd.f32 %v160, %v245
    %v247 = vpop.f32.mrb[0].mxu0
    %248 = vmatprep.mubr.f32.mxu0 0.0
    %249 = vmatmul.mubr.f32.gmra.mrb[0].mxu0 %v169
    %v250 = vpop.f32.mrb[0].mxu0
    %v251 = vadd.f32 %v160, %v250
    %v252 = vpop.f32.mrb[0].mxu0
    %253 = vmatprep.mubr.f32.mxu0 0.0
    %254 = vmatmul.mubr.f32.gmra.mrb[0].mxu0 %v172
    %v255 = vpop.f32.mrb[0].mxu0
    %v256 = vadd.f32 %v160, %v255
    %v257 = vpop.f32.mrb[0].mxu0
    %258 = vdwg.mxu0
    %v259 = vmax.f32 %v241, 0.0
    %v260 = vmax.f32 %v246, 0.0
    %v261 = vmax.f32 %v251, 0.0
    %v262 = vmax.f32 %v256, 0.0
    %v263 = vadd.f32 %v259, %v47
    %v264 = vadd.f32 %v260, %v48
    %v265 = vadd.f32 %v261, %v49
    %v266 = vadd.f32 %v262, %v50
    %267 = vxpose.xlu0.b32.start [1/16] %v263, 128
    %268 = vxpose.xlu0.b32.cont [2/16] %v264, 128
    %269 = vxpose.xlu0.b32.cont [3/16] %v265, 128
    %270 = vxpose.xlu0.b32.cont [4/16] %v266, 128
    %271 = vxpose.xlu0.b32.cont [5/16] 0.0, 128
    %272 = vxpose.xlu0.b32.cont [6/16] 0.0, 128
    %273 = vxpose.xlu0.b32.cont [7/16] 0.0, 128
    %274 = vxpose.xlu0.b32.cont [8/16] 0.0, 128
    %275 = vxpose.xlu0.b32.cont [9/16] 0.0, 128
    %276 = vxpose.xlu0.b32.cont [10/16] 0.0, 128
    %277 = vxpose.xlu0.b32.cont [11/16] 0.0, 128
    %278 = vxpose.xlu0.b32.cont [12/16] 0.0, 128
    %279 = vxpose.xlu0.b32.cont [13/16] 0.0, 128
    %280 = vxpose.xlu0.b32.cont [14/16] 0.0, 128
    %281 = vxpose.xlu0.b32.cont [15/16] 0.0, 128
    %282 = vxpose.xlu0.b32.end [16/16] 0.0, 128
    %v283 = vpop.trf.xlu0
    %v284 = vpop.trf.xlu0
    %v285 = vpop.trf.xlu0
    %v286 = vpop.trf.xlu0
    %v287 = vpop.trf.xlu0
    %v288 = vpop.trf.xlu0
    %v289 = vpop.trf.xlu0
    %v290 = vpop.trf.xlu0
    %v291 = vpop.trf.xlu0
    %v292 = vpop.trf.xlu0
    %v293 = vpop.trf.xlu0
    %v294 = vpop.trf.xlu0
    %v295 = vpop.trf.xlu0
    %v296 = vpop.trf.xlu0
    %v297 = vpop.trf.xlu0
    %v298 = vpop.trf.xlu0
    %v300 = vsel %vm161, %v283, 0
    %302 = vmatprep.subr.mxu0 0.0
    %303 = vmatpush1.msra.mxu0 %v28
    %304 = vmatprep.subr.mxu0 0.0
    %305 = vmatpush1.msra.mxu0 %v29
    %306 = vmatprep.subr.mxu0 0.0
    %307 = vmatpush1.msra.mxu0 %v30
    %308 = vmatprep.subr.mxu0 0.0
    %309 = vmatpush1.msra.mxu0 %v31
    %310 = vmatprep.subr.mxu0 0.0
    %311 = vmatpush1.msra.mxu0 0.0
    %312 = vmatprep.subr.mxu0 0.0
    %313 = vmatpush1.msra.mxu0 0.0
    %314 = vmatprep.subr.mxu0 0.0
    %315 = vmatpush1.msra.mxu0 0.0
    %316 = vmatprep.subr.mxu0 0.0
    %317 = vmatpush1.msra.mxu0 0.0
    %318 = vmatprep.subr.mxu0 0.0
    %319 = vmatpush1.msra.mxu0 0.0
    %320 = vmatprep.subr.mxu0 0.0
    %321 = vmatpush1.msra.mxu0 0.0
    %322 = vmatprep.subr.mxu0 0.0
    %323 = vmatpush1.msra.mxu0 0.0
    %324 = vmatprep.subr.mxu0 0.0
    %325 = vmatpush1.msra.mxu0 0.0
    %326 = vmatprep.subr.mxu0 0.0
    %327 = vmatpush1.msra.mxu0 0.0
    %328 = vmatprep.subr.mxu0 0.0
    %329 = vmatpush1.msra.mxu0 0.0
    %330 = vmatprep.subr.mxu0 0.0
    %331 = vmatpush1.msra.mxu0 0.0
    %332 = vmatprep.subr.mxu0 0.0
    %333 = vmatpush1.msra.mxu0 0.0
    %334 = vmatprep.subr.mxu0 0.0
    %335 = vmatpush1.msra.mxu0 0.0
    %336 = vmatprep.subr.mxu0 0.0
    %337 = vmatpush1.msra.mxu0 0.0
    %338 = vmatprep.subr.mxu0 0.0
    %339 = vmatpush1.msra.mxu0 0.0
    %340 = vmatprep.subr.mxu0 0.0
    %341 = vmatpush1.msra.mxu0 0.0
    %342 = vmatprep.subr.mxu0 0.0
    %343 = vmatpush1.msra.mxu0 0.0
    %344 = vmatprep.subr.mxu0 0.0
    %345 = vmatpush1.msra.mxu0 0.0
    %346 = vmatprep.subr.mxu0 0.0
    %347 = vmatpush1.msra.mxu0 0.0
    %348 = vmatprep.subr.mxu0 0.0
    %349 = vmatpush1.msra.mxu0 0.0
    %350 = vmatprep.subr.mxu0 0.0
    %351 = vmatpush1.msra.mxu0 0.0
    %352 = vmatprep.subr.mxu0 0.0
    %353 = vmatpush1.msra.mxu0 0.0
    %354 = vmatprep.subr.mxu0 0.0
    %355 = vmatpush1.msra.mxu0 0.0
    %356 = vmatprep.subr.mxu0 0.0
    %357 = vmatpush1.msra.mxu0 0.0
    %358 = vmatprep.subr.mxu0 0.0
    %359 = vmatpush1.msra.mxu0 0.0
    %360 = vmatprep.subr.mxu0 0.0
    %361 = vmatpush1.msra.mxu0 0.0
    %362 = vmatprep.subr.mxu0 0.0
    %363 = vmatpush1.msra.mxu0 0.0
    %364 = vmatprep.subr.mxu0 0.0
    %365 = vmatpush1.msra.mxu0 0.0
    %366 = vmatprep.mubr.f32.mxu0 0.0
    %367 = vmatmul.mubr.f32.gmra.mrb[0].mxu0 %v300
    %v368 = vpop.f32.mrb[0].mxu0
    %v369 = vadd.f32 0.0, %v368
    %v370 = vpop.f32.mrb[0].mxu0
    %371 = vdwg.mxu0
    %372 = vmatprep.subr.mxu0 0.0
    %373 = vmatpush1.msra.mxu0 %v32
    %374 = vmatprep.subr.mxu0 0.0
    %375 = vmatpush1.msra.mxu0 %v33
    %376 = vmatprep.subr.mxu0 0.0
    %377 = vmatpush1.msra.mxu0 %v34
    %378 = vmatprep.subr.mxu0 0.0
    %379 = vmatpush1.msra.mxu0 %v35
    %380 = vmatprep.subr.mxu0 0.0
    %381 = vmatpush1.msra.mxu0 0.0
    %382 = vmatprep.subr.mxu0 0.0
    %383 = vmatpush1.msra.mxu0 0.0
    %384 = vmatprep.subr.mxu0 0.0
    %385 = vmatpush1.msra.mxu0 0.0
    %386 = vmatprep.subr.mxu0 0.0
    %387 = vmatpush1.msra.mxu0 0.0
    %388 = vmatprep.subr.mxu0 0.0
    %389 = vmatpush1.msra.mxu0 0.0
    %390 = vmatprep.subr.mxu0 0.0
    %391 = vmatpush1.msra.mxu0 0.0
    %392 = vmatprep.subr.mxu0 0.0
    %393 = vmatpush1.msra.mxu0 0.0
    %394 = vmatprep.subr.mxu0 0.0
    %395 = vmatpush1.msra.mxu0 0.0
    %396 = vmatprep.subr.mxu0 0.0
    %397 = vmatpush1.msra.mxu0 0.0
    %398 = vmatprep.subr.mxu0 0.0
    %399 = vmatpush1.msra.mxu0 0.0
    %400 = vmatprep.subr.mxu0 0.0
    %401 = vmatpush1.msra.mxu0 0.0
    %402 = vmatprep.subr.mxu0 0.0
    %403 = vmatpush1.msra.mxu0 0.0
    %404 = vmatprep.subr.mxu0 0.0
    %405 = vmatpush1.msra.mxu0 0.0
    %406 = vmatprep.subr.mxu0 0.0
    %407 = vmatpush1.msra.mxu0 0.0
    %408 = vmatprep.subr.mxu0 0.0
    %409 = vmatpush1.msra.mxu0 0.0
    %410 = vmatprep.subr.mxu0 0.0
    %411 = vmatpush1.msra.mxu0 0.0
    %412 = vmatprep.subr.mxu0 0.0
    %413 = vmatpush1.msra.mxu0 0.0
    %414 = vmatprep.subr.mxu0 0.0
    %415 = vmatpush1.msra.mxu0 0.0
    %416 = vmatprep.subr.mxu0 0.0
    %417 = vmatpush1.msra.mxu0 0.0
    %418 = vmatprep.subr.mxu0 0.0
    %419 = vmatpush1.msra.mxu0 0.0
    %420 = vmatprep.subr.mxu0 0.0
    %421 = vmatpush1.msra.mxu0 0.0
    %422 = vmatprep.subr.mxu0 0.0
    %423 = vmatpush1.msra.mxu0 0.0
    %424 = vmatprep.subr.mxu0 0.0
    %425 = vmatpush1.msra.mxu0 0.0
    %426 = vmatprep.subr.mxu0 0.0
    %427 = vmatpush1.msra.mxu0 0.0
    %428 = vmatprep.subr.mxu0 0.0
    %429 = vmatpush1.msra.mxu0 0.0
    %430 = vmatprep.subr.mxu0 0.0
    %431 = vmatpush1.msra.mxu0 0.0
    %432 = vmatprep.subr.mxu0 0.0
    %433 = vmatpush1.msra.mxu0 0.0
    %434 = vmatprep.subr.mxu0 0.0
    %435 = vmatpush1.msra.mxu0 0.0
    %436 = vmatprep.mubr.f32.mxu0 0.0
    %437 = vmatmul.mubr.f32.gmra.mrb[0].mxu0 %v300
    %v438 = vpop.f32.mrb[0].mxu0
    %v439 = vadd.f32 0.0, %v438
    %v440 = vpop.f32.mrb[0].mxu0
    %441 = vdwg.mxu0
    %v443 = vrot.slane %v439, 4
    %v445 = vsel %vm64, %v369, %v443
    %447 = vset.pattern.permute.xlu0 32
    %448 = vperm.xlu0 %447, %v36
    %v449 = vpop.permute.xlu0 %448
    %452 = vset.pattern.permute.xlu0 32
    %453 = vperm.xlu0 %452, %v37
    %v454 = vpop.permute.xlu0 %453
    %457 = vset.pattern.permute.xlu0 32
    %458 = vperm.xlu0 %457, %v38
    %v459 = vpop.permute.xlu0 %458
    %462 = vset.pattern.permute.xlu0 32
    %463 = vperm.xlu0 %462, %v39
    %v464 = vpop.permute.xlu0 %463
    %vm466 = vcmask 64512
    %v468 = vsel %vm466, %v40, 0
    %v471 = vsel %vm466, %v41, 0
    %v474 = vsel %vm466, %v42, 0
    %v477 = vsel %vm466, %v43, 0
    %479 = vmatprep.subr.mxu0 0.0
    %480 = vmatpush1.msra.mxu0 %v445
    %481 = vmatprep.subr.mxu0 0.0
    %482 = vmatpush1.msra.mxu0 0.0
    %483 = vmatprep.subr.mxu0 0.0
    %484 = vmatpush1.msra.mxu0 0.0
    %485 = vmatprep.subr.mxu0 0.0
    %486 = vmatpush1.msra.mxu0 0.0
    %487 = vmatprep.subr.mxu0 0.0
    %488 = vmatpush1.msra.mxu0 0.0
    %489 = vmatprep.subr.mxu0 0.0
    %490 = vmatpush1.msra.mxu0 0.0
    %491 = vmatprep.subr.mxu0 0.0
    %492 = vmatpush1.msra.mxu0 0.0
    %493 = vmatprep.subr.mxu0 0.0
    %494 = vmatpush1.msra.mxu0 0.0
    %495 = vmatprep.subr.mxu0 0.0
    %496 = vmatpush1.msra.mxu0 0.0
    %497 = vmatprep.subr.mxu0 0.0
    %498 = vmatpush1.msra.mxu0 0.0
    %499 = vmatprep.subr.mxu0 0.0
    %500 = vmatpush1.msra.mxu0 0.0
    %501 = vmatprep.subr.mxu0 0.0
    %502 = vmatpush1.msra.mxu0 0.0
    %503 = vmatprep.subr.mxu0 0.0
    %504 = vmatpush1.msra.mxu0 0.0
    %505 = vmatprep.subr.mxu0 0.0
    %506 = vmatpush1.msra.mxu0 0.0
    %507 = vmatprep.subr.mxu0 0.0
    %508 = vmatpush1.msra.mxu0 0.0
    %509 = vmatprep.subr.mxu0 0.0
    %510 = vmatpush1.msra.mxu0 0.0
    %511 = vmatprep.subr.mxu0 0.0
    %512 = vmatpush1.msra.mxu0 0.0
    %513 = vmatprep.subr.mxu0 0.0
    %514 = vmatpush1.msra.mxu0 0.0
    %515 = vmatprep.subr.mxu0 0.0
    %516 = vmatpush1.msra.mxu0 0.0
    %517 = vmatprep.subr.mxu0 0.0
    %518 = vmatpush1.msra.mxu0 0.0
    %519 = vmatprep.subr.mxu0 0.0
    %520 = vmatpush1.msra.mxu0 0.0
    %521 = vmatprep.subr.mxu0 0.0
    %522 = vmatpush1.msra.mxu0 0.0
    %523 = vmatprep.subr.mxu0 0.0
    %524 = vmatpush1.msra.mxu0 0.0
    %525 = vmatprep.subr.mxu0 0.0
    %526 = vmatpush1.msra.mxu0 0.0
    %527 = vmatprep.subr.mxu0 0.0
    %528 = vmatpush1.msra.mxu0 0.0
    %529 = vmatprep.subr.mxu0 0.0
    %530 = vmatpush1.msra.mxu0 0.0
    %531 = vmatprep.subr.mxu0 0.0
    %532 = vmatpush1.msra.mxu0 0.0
    %533 = vmatprep.subr.mxu0 0.0
    %534 = vmatpush1.msra.mxu0 0.0
    %535 = vmatprep.subr.mxu0 0.0
    %536 = vmatpush1.msra.mxu0 0.0
    %537 = vmatprep.subr.mxu0 0.0
    %538 = vmatpush1.msra.mxu0 0.0
    %539 = vmatprep.subr.mxu0 0.0
    %540 = vmatpush1.msra.mxu0 0.0
    %541 = vmatprep.subr.mxu0 0.0
    %542 = vmatpush1.msra.mxu0 0.0
    %543 = vmatprep.mubr.f32.mxu0 0.0
    %544 = vmatmul.mubr.f32.gmra.mrb[0].mxu0 %v468
    %v545 = vpop.f32.mrb[0].mxu0
    %v546 = vadd.f32 %v449, %v545
    %v547 = vpop.f32.mrb[0].mxu0
    %548 = vmatprep.mubr.f32.mxu0 0.0
    %549 = vmatmul.mubr.f32.gmra.mrb[0].mxu0 %v471
    %v550 = vpop.f32.mrb[0].mxu0
    %v551 = vadd.f32 %v454, %v550
    %v552 = vpop.f32.mrb[0].mxu0
    %553 = vmatprep.mubr.f32.mxu0 0.0
    %554 = vmatmul.mubr.f32.gmra.mrb[0].mxu0 %v474
    %v555 = vpop.f32.mrb[0].mxu0
    %v556 = vadd.f32 %v459, %v555
    %v557 = vpop.f32.mrb[0].mxu0
    %558 = vmatprep.mubr.f32.mxu0 0.0
    %559 = vmatmul.mubr.f32.gmra.mrb[0].mxu0 %v477
    %v560 = vpop.f32.mrb[0].mxu0
    %v561 = vadd.f32 %v464, %v560
    %v562 = vpop.f32.mrb[0].mxu0
    %563 = vdwg.mxu0
    %v564 = vmul.f32 %v546, 0.01
    %v565 = vmul.f32 %v551, 0.01
    %v566 = vmul.f32 %v556, 0.01
    %v567 = vmul.f32 %v561, 0.01
    %v568 = vmax.f32 %v546, %v564
    %v569 = vmax.f32 %v551, %v565
    %v570 = vmax.f32 %v556, %v566
    %v571 = vmax.f32 %v561, %v567
    %572 = vset.pattern.permute.xlu0 33
    %573 = vperm.xlu0 %572, %v36
    %v574 = vpop.permute.xlu0 %573
    %576 = vset.pattern.permute.xlu0 33
    %577 = vperm.xlu0 %576, %v37
    %v578 = vpop.permute.xlu0 %577
    %580 = vset.pattern.permute.xlu0 33
    %581 = vperm.xlu0 %580, %v38
    %v582 = vpop.permute.xlu0 %581
    %584 = vset.pattern.permute.xlu0 33
    %585 = vperm.xlu0 %584, %v39
    %v586 = vpop.permute.xlu0 %585
    %v588 = vsel %vm161, %v36, 0
    %v590 = vsel %vm161, %v37, 0
    %v592 = vsel %vm161, %v38, 0
    %v594 = vsel %vm161, %v39, 0
    %596 = vmatprep.subr.mxu0 0.0
    %597 = vmatpush1.msra.mxu0 %v568
    %598 = vmatprep.subr.mxu0 0.0
    %599 = vmatpush1.msra.mxu0 %v569
    %600 = vmatprep.subr.mxu0 0.0
    %601 = vmatpush1.msra.mxu0 %v570
    %602 = vmatprep.subr.mxu0 0.0
    %603 = vmatpush1.msra.mxu0 %v571
    %604 = vmatprep.subr.mxu0 0.0
    %605 = vmatpush1.msra.mxu0 0.0
    %606 = vmatprep.subr.mxu0 0.0
    %607 = vmatpush1.msra.mxu0 0.0
    %608 = vmatprep.subr.mxu0 0.0
    %609 = vmatpush1.msra.mxu0 0.0
    %610 = vmatprep.subr.mxu0 0.0
    %611 = vmatpush1.msra.mxu0 0.0
    %612 = vmatprep.subr.mxu0 0.0
    %613 = vmatpush1.msra.mxu0 0.0
    %614 = vmatprep.subr.mxu0 0.0
    %615 = vmatpush1.msra.mxu0 0.0
    %616 = vmatprep.subr.mxu0 0.0
    %617 = vmatpush1.msra.mxu0 0.0
    %618 = vmatprep.subr.mxu0 0.0
    %619 = vmatpush1.msra.mxu0 0.0
    %620 = vmatprep.subr.mxu0 0.0
    %621 = vmatpush1.msra.mxu0 0.0
    %622 = vmatprep.subr.mxu0 0.0
    %623 = vmatpush1.msra.mxu0 0.0
    %624 = vmatprep.subr.mxu0 0.0
    %625 = vmatpush1.msra.mxu0 0.0
    %626 = vmatprep.subr.mxu0 0.0
    %627 = vmatpush1.msra.mxu0 0.0
    %628 = vmatprep.subr.mxu0 0.0
    %629 = vmatpush1.msra.mxu0 0.0
    %630 = vmatprep.subr.mxu0 0.0
    %631 = vmatpush1.msra.mxu0 0.0
    %632 = vmatprep.subr.mxu0 0.0
    %633 = vmatpush1.msra.mxu0 0.0
    %634 = vmatprep.subr.mxu0 0.0
    %635 = vmatpush1.msra.mxu0 0.0
    %636 = vmatprep.subr.mxu0 0.0
    %637 = vmatpush1.msra.mxu0 0.0
    %638 = vmatprep.subr.mxu0 0.0
    %639 = vmatpush1.msra.mxu0 0.0
    %640 = vmatprep.subr.mxu0 0.0
    %641 = vmatpush1.msra.mxu0 0.0
    %642 = vmatprep.subr.mxu0 0.0
    %643 = vmatpush1.msra.mxu0 0.0
    %644 = vmatprep.subr.mxu0 0.0
    %645 = vmatpush1.msra.mxu0 0.0
    %646 = vmatprep.subr.mxu0 0.0
    %647 = vmatpush1.msra.mxu0 0.0
    %648 = vmatprep.subr.mxu0 0.0
    %649 = vmatpush1.msra.mxu0 0.0
    %650 = vmatprep.subr.mxu0 0.0
    %651 = vmatpush1.msra.mxu0 0.0
    %652 = vmatprep.subr.mxu0 0.0
    %653 = vmatpush1.msra.mxu0 0.0
    %654 = vmatprep.subr.mxu0 0.0
    %655 = vmatpush1.msra.mxu0 0.0
    %656 = vmatprep.subr.mxu0 0.0
    %657 = vmatpush1.msra.mxu0 0.0
    %658 = vmatprep.subr.mxu0 0.0
    %659 = vmatpush1.msra.mxu0 0.0
    %660 = vmatprep.mubr.f32.mxu0 0.0
    %661 = vmatmul.mubr.f32.gmra.mrb[0].mxu0 %v588
    %v662 = vpop.f32.mrb[0].mxu0
    %v663 = vadd.f32 %v574, %v662
    %v664 = vpop.f32.mrb[0].mxu0
    %665 = vmatprep.mubr.f32.mxu0 0.0
    %666 = vmatmul.mubr.f32.gmra.mrb[0].mxu0 %v590
    %v667 = vpop.f32.mrb[0].mxu0
    %v668 = vadd.f32 %v578, %v667
    %v669 = vpop.f32.mrb[0].mxu0
    %670 = vmatprep.mubr.f32.mxu0 0.0
    %671 = vmatmul.mubr.f32.gmra.mrb[0].mxu0 %v592
    %v672 = vpop.f32.mrb[0].mxu0
    %v673 = vadd.f32 %v582, %v672
    %v674 = vpop.f32.mrb[0].mxu0
    %675 = vmatprep.mubr.f32.mxu0 0.0
    %676 = vmatmul.mubr.f32.gmra.mrb[0].mxu0 %v594
    %v677 = vpop.f32.mrb[0].mxu0
    %v678 = vadd.f32 %v586, %v677
    %v679 = vpop.f32.mrb[0].mxu0
    %680 = vdwg.mxu0
    %v681 = vmul.f32 %v663, 0.01
    %v682 = vmul.f32 %v668, 0.01
    %v683 = vmul.f32 %v673, 0.01
    %v684 = vmul.f32 %v678, 0.01
    %v685 = vmax.f32 %v663, %v681
    %v686 = vmax.f32 %v668, %v682
    %v687 = vmax.f32 %v673, %v683
    %v688 = vmax.f32 %v678, %v684
    %690 = vset.pattern.permute.xlu0 32
    %691 = vperm.xlu0 %690, %v44
    %v692 = vpop.permute.xlu0 %691
    %v694 = vsel %vm161, %v44, 0
    %696 = vmatprep.subr.mxu0 0.0
    %697 = vmatpush1.msra.mxu0 %v685
    %698 = vmatprep.subr.mxu0 0.0
    %699 = vmatpush1.msra.mxu0 %v686
    %700 = vmatprep.subr.mxu0 0.0
    %701 = vmatpush1.msra.mxu0 %v687
    %702 = vmatprep.subr.mxu0 0.0
    %703 = vmatpush1.msra.mxu0 %v688
    %704 = vmatprep.subr.mxu0 0.0
    %705 = vmatpush1.msra.mxu0 0.0
    %706 = vmatprep.subr.mxu0 0.0
    %707 = vmatpush1.msra.mxu0 0.0
    %708 = vmatprep.subr.mxu0 0.0
    %709 = vmatpush1.msra.mxu0 0.0
    %710 = vmatprep.subr.mxu0 0.0
    %711 = vmatpush1.msra.mxu0 0.0
    %712 = vmatprep.subr.mxu0 0.0
    %713 = vmatpush1.msra.mxu0 0.0
    %714 = vmatprep.subr.mxu0 0.0
    %715 = vmatpush1.msra.mxu0 0.0
    %716 = vmatprep.subr.mxu0 0.0
    %717 = vmatpush1.msra.mxu0 0.0
    %718 = vmatprep.subr.mxu0 0.0
    %719 = vmatpush1.msra.mxu0 0.0
    %720 = vmatprep.subr.mxu0 0.0
    %721 = vmatpush1.msra.mxu0 0.0
    %722 = vmatprep.subr.mxu0 0.0
    %723 = vmatpush1.msra.mxu0 0.0
    %724 = vmatprep.subr.mxu0 0.0
    %725 = vmatpush1.msra.mxu0 0.0
    %726 = vmatprep.subr.mxu0 0.0
    %727 = vmatpush1.msra.mxu0 0.0
    %728 = vmatprep.subr.mxu0 0.0
    %729 = vmatpush1.msra.mxu0 0.0
    %730 = vmatprep.subr.mxu0 0.0
    %731 = vmatpush1.msra.mxu0 0.0
    %732 = vmatprep.subr.mxu0 0.0
    %733 = vmatpush1.msra.mxu0 0.0
    %734 = vmatprep.subr.mxu0 0.0
    %735 = vmatpush1.msra.mxu0 0.0
    %736 = vmatprep.subr.mxu0 0.0
    %737 = vmatpush1.msra.mxu0 0.0
    %738 = vmatprep.subr.mxu0 0.0
    %739 = vmatpush1.msra.mxu0 0.0
    %740 = vmatprep.subr.mxu0 0.0
    %741 = vmatpush1.msra.mxu0 0.0
    %742 = vmatprep.subr.mxu0 0.0
    %743 = vmatpush1.msra.mxu0 0.0
    %744 = vmatprep.subr.mxu0 0.0
    %745 = vmatpush1.msra.mxu0 0.0
    %746 = vmatprep.subr.mxu0 0.0
    %747 = vmatpush1.msra.mxu0 0.0
    %748 = vmatprep.subr.mxu0 0.0
    %749 = vmatpush1.msra.mxu0 0.0
    %750 = vmatprep.subr.mxu0 0.0
    %751 = vmatpush1.msra.mxu0 0.0
    %752 = vmatprep.subr.mxu0 0.0
    %753 = vmatpush1.msra.mxu0 0.0
    %754 = vmatprep.subr.mxu0 0.0
    %755 = vmatpush1.msra.mxu0 0.0
    %756 = vmatprep.subr.mxu0 0.0
    %757 = vmatpush1.msra.mxu0 0.0
    %758 = vmatprep.subr.mxu0 0.0
    %759 = vmatpush1.msra.mxu0 0.0
    %760 = vmatprep.mubr.f32.mxu0 0.0
    %761 = vmatmul.mubr.f32.gmra.mrb[0].mxu0 %v694
    %v762 = vpop.f32.mrb[0].mxu0
    %v763 = vadd.f32 %v692, %v762
    %v764 = vpop.f32.mrb[0].mxu0
    %765 = vdwg.mxu0
    %v766 = vadd.f32 %v763, 1e-10
    %v767 = vmax.f32 %v766, 0.0
    %v768 = vand.u32 2147483647, %v766
    %v769 = vsub.f32 0.0, %v768
    %v770 = vmul.f32 %v769, 1.442695
    %v771 = vpow.pop %v770
    %v772 = vadd.f32 %v771, 1.0
    %v773 = vlog2.pop %v772
    %v774 = vmul.f32 %v773, 0.6931472
    %v775 = vmul.f32 -0.5, %v771
    %v776 = vadd.f32 %v775, 1.0
    %v777 = vmul.f32 %v776, %v771
    %v778 = vand.u32 2147483647, %v771
    %vm779 = vcmp.lt.f32.partialorder %v778, 0.0004427343
    %v780 = vsel %vm779, %v777, %v774
    %v781 = vadd.f32 %v767, %v780
    %vm782 = vcmp.gt.f32.partialorder %v766, 20.0
    %v783 = vsel %vm782, %v766, %v781
    %v784 = vmax.f32 %v763, -20.0
    %v785 = vmin.f32 %v784, 2.0
    %v786 = vmul.f32 %v785, 1.442695
    %v787 = vpow.pop %v786
    %vm788 = vcmask 1040384
    %v789 = vsel %vm788, %v783, %v787
    %790 = vst [vmem:[%s3] sm:$0x3] %v789
    // Predicated region
    $region18: #{forward.1} parent=1 // pred_check
      _
    $region19: #{forward.1} parent=1 // pred_check_branch
      %792 = sbr.rel (0) target = $region21
    $region20: #{forward.1} parent=1 // pred_region
      _
    $region21: #{forward.1} parent=1 // pred_fallthru
      _
    // Predicated region
    $region22: #{forward.1} parent=1 // pred_check
      _
    $region23: #{forward.1} parent=1 // pred_check_branch
      %794 = sbr.rel (0) target = $region25
    $region24: #{forward.1} parent=1 // pred_region
      _
    $region25: #{forward.1} parent=1 // pred_fallthru
      _
    %795 = vsyncpa [#allocation3], 1

</llo_original>
